<compile_context>
chip_gen: v7x
topology: tpu7x:2x2x1
jax: 0.10.0
libtpu: 0.0.40
codegen_flags: <defaults>
</compile_context>

<pallas_src>
import functools

import jax
import jax.numpy as jnp
from jax import lax
from jax.experimental import pallas as pl
from jax.experimental.pallas import tpu as pltpu


def _vmem_capacity_bytes():
    """Physical VMEM of the local TPU; conservative (v7x-sized) fallback."""
    try:
        return int(pltpu.get_tpu_info().vmem_capacity_bytes)
    except Exception:
        return 64 * 1024 * 1024


def _choose_tile_k(k_total, n, c, itemsize, budget, max_tile_k=None):
    """Largest queue tile (multiple of 128) fitting `budget` bytes of VMEM.

    Prefers (a) a single tile covering all of K (no pad, no correction) and
    (b) a tile that divides K exactly (no padded HBM copy of the queue).
    Returns (tile_k, k_pad, num_tiles).
    """
    fixed = 2 * n * c * itemsize + 4 * n * 4 + (4 << 20)   # q dbl-buffer, out, slack
    per_k = 2 * c * itemsize + c * 4 + 2 * n * 4           # queue dbl-buf, relayout, f32 tmps
    max_tile = max(128, (budget - fixed) // per_k)
    max_tile = min(max_tile, 2048)                         # diminishing returns past ~1-2K
    if max_tile_k is not None:
        max_tile = min(max_tile, max_tile_k)
    if k_total <= max_tile:
        return int(k_total), 0, 1                          # single tile: no pad, no mask
    base = max(128, (max_tile // 128) * 128)
    tile = base
    for cand in range(base, max(base // 2, 128) - 1, -128):
        if k_total % cand == 0:                            # prefer a divisor of K
            tile = cand
            break
    num_tiles = -(-k_total // tile)
    k_pad = num_tiles * tile - k_total
    return int(tile), int(k_pad), int(num_tiles)


def _moco_neg_sum_kernel(q_ref, queue_ref, partial_ref, *, inv_temp):
    """Accumulate per-row sum_j exp(<q_i, queue_j> / temp) over K tiles."""
    kk = pl.program_id(1)

    @pl.when(kk == 0)
    def _init():
        partial_ref[...] = jnp.zeros_like(partial_ref)

    # (N, C) x (TILE_K, C) contracting C with C -> (N, TILE_K).  The queue tile
    # stays in its native layout; f32 accumulation on the MXU.
    neg_sim = lax.dot_general(
        q_ref[...], queue_ref[...],
        dimension_numbers=(((1,), (1,)), ((), ())),
        preferred_element_type=jnp.float32)
    tile_sum = jnp.sum(jnp.exp(neg_sim * jnp.float32(inv_temp)),
                       axis=1, keepdims=True)              # (N, 1)
    partial_ref[...] += tile_sum[None, :, :]               # resident accumulator


def moco_loss(q, k, queue, temp=0.1, max_tile_k=None):
    n, c = q.shape
    k_total, c2 = queue.shape
    assert c == c2 and k.shape == (n, c)
    itemsize = jnp.dtype(queue.dtype).itemsize

    cap = _vmem_capacity_bytes()
    budget = min(cap // 2, 64 * 1024 * 1024)
    tile_k, k_pad, num_tiles = _choose_tile_k(
        k_total, n, c, itemsize, budget, max_tile_k)

    if k_pad:
        # Only taken when no candidate tile divides K.  Padded rows are exactly
        # zero, so each contributes exp(0) = 1; corrected once in the epilogue.
        queue = jnp.pad(queue, ((0, k_pad), (0, 0)))

    # Leading "parallel" axis so v7x megacore can split the queue stream.
    n_split = 2 if (num_tiles >= 2 and num_tiles % 2 == 0) else 1
    steps = num_tiles // n_split

    est_bytes = (2 * n * c * itemsize          # q (resident, double-buffered)
                 + 2 * tile_k * c * itemsize   # queue tile double buffer
                 + tile_k * c * 4              # possible on-chip relayout copy
                 + 2 * n * tile_k * 4          # f32 sim/exp intermediates
                 + 4 * n * 4)                  # output block
    vmem_limit = int(min(cap - (8 << 20), max(est_bytes + (16 << 20), 32 << 20)))

    kernel = functools.partial(_moco_neg_sum_kernel, inv_temp=float(1.0 / temp))

    partial = pl.pallas_call(
        kernel,
        out_shape=jax.ShapeDtypeStruct((n_split, n, 1), jnp.float32),
        grid_spec=pltpu.PrefetchScalarGridSpec(
            num_scalar_prefetch=0,
            grid=(n_split, steps),
            in_specs=[
                pl.BlockSpec((n, c), lambda p, kk: (0, 0)),                   # q resident
                pl.BlockSpec((tile_k, c), lambda p, kk: (p * steps + kk, 0)),  # queue tile
            ],
            out_specs=pl.BlockSpec((1, n, 1), lambda p, kk: (p, 0, 0)),
        ),
        compiler_params=pltpu.CompilerParams(
            dimension_semantics=("parallel", "arbitrary"),
            vmem_limit_bytes=vmem_limit,
        ),
    )(q, queue)

    # Tiny epilogue in plain JAX: O(N*C) positive term + O(N^2) log/mean.
    neg = jnp.sum(partial[:, :, 0], axis=0)                              # (N,)
    if k_pad:
        neg = neg - jnp.float32(k_pad)                                   # exp(0) = 1 each

    pos = jnp.sum(q.astype(jnp.float32) * k.astype(jnp.float32),
                  axis=1) * jnp.float32(1.0 / temp)                      # (N,) = logit/temp
    # PyTorch broadcast: loss[i, j] = -log(pos_exp[i] / (pos_exp[i] + neg[j]))
    #                              = log(pos_exp[i] + neg[j]) - pos[i]
    log_denom = jnp.log(jnp.exp(pos)[:, None] + neg[None, :])            # (N, N)
    return jnp.mean(log_denom) - jnp.mean(pos)


def moco_loss_ref(q, k, queue, temp=0.1):
    # Pure-JAX reference reproducing the PyTorch semantics (incl. broadcast).
    q = q.astype(jnp.float32)
    k = k.astype(jnp.float32)
    queue = queue.astype(jnp.float32)
    pos_exp = jnp.exp(jnp.sum(q * k, axis=1, keepdims=True) / temp)   # (N, 1)
    neg = jnp.sum(jnp.exp(q @ queue.T / temp), axis=1)                # (N,)
    denom = neg[None, :] + pos_exp                                    # (N, N)
    return jnp.mean(-jnp.log(pos_exp / denom))


if __name__ == "__main__":
    key = jax.random.PRNGKey(0)
    kq, kk_rng, kqueue = jax.random.split(key, 3)

    # Small shapes; C=96 (non-multiple of 128) and K=500 exercise the
    # "block equals full dim" path and the single-tile path.
    N, C, K = 8, 96, 500
    q = jax.random.normal(kq, (N, C), dtype=jnp.float32)
    k = jax.random.normal(kk_rng, (N, C), dtype=jnp.float32)
    queue = jax.random.normal(kqueue, (K, C), dtype=jnp.float32)
    # L2-normalize like a typical MoCo pipeline (keeps exp() well-behaved).
    q = q / jnp.linalg.norm(q, axis=1, keepdims=True)
    k = k / jnp.linalg.norm(k, axis=1, keepdims=True)
    queue = queue / jnp.linalg.norm(queue, axis=1, keepdims=True)

    ref = moco_loss_ref(q, k, queue, temp=0.1)

    # 1) Default path: single queue tile (no pad, no split).
    out = jax.block_until_ready(moco_loss(q, k, queue, temp=0.1))
    assert jnp.allclose(out, ref, rtol=1e-4, atol=1e-4), (out, ref)

    # 2) Forced-small tile: exercises multi-tile streaming, the zero-pad +
    #    constant-correction path, and the 2-way "parallel" megacore split.
    out_tiled = jax.block_until_ready(moco_loss(q, k, queue, temp=0.1,
                                                max_tile_k=128))
    assert jnp.allclose(out_tiled, ref, rtol=1e-4, atol=1e-4), (out_tiled, ref)

    print("KERNEL_OK")
</pallas_src>

<mosaic_0001>
module attributes {stable_mosaic.version = 11 : i64} {
  func.func @_moco_neg_sum_kernel(%arg0: i32, %arg1: i32, %arg2: memref<8x96xf32, #tpu.memory_space<vmem>>, %arg3: memref<500x96xf32, #tpu.memory_space<vmem>>, %arg4: memref<1x8x1xf32, #tpu.memory_space<vmem>>) attributes {dimension_semantics = [#tpu.dimension_semantics<parallel>, #tpu.dimension_semantics<arbitrary>], iteration_bounds = array<i64: 1, 1>, scalar_prefetch = 0 : i64, scratch_operands = 0 : i64, tpu.core_type = #tpu.core_type<tc>, window_params = [{pipeline_mode = #tpu.pipeline_mode<synchronous>, transform_indices = @transform_0, window_bounds = array<i64: 8, 96>}, {transform_indices = @transform_1, window_bounds = array<i64: 500, 96>}, {transform_indices = @transform_2, window_bounds = array<i64: 1, 8, 1>}]} {
    %c0_i32 = arith.constant 0 : i32
    %0 = arith.cmpi eq, %arg1, %c0_i32 : i32
    %1 = arith.extui %0 : i1 to i32
    %c0_i32_0 = arith.constant 0 : i32
    %2 = arith.cmpi ne, %1, %c0_i32_0 : i32
    scf.if %2 {
      %cst_12 = arith.constant 0.000000e+00 : f32
      %15 = vector.broadcast %cst_12 : f32 to vector<1x8x1xf32>
      %c0_13 = arith.constant 0 : index
      %c0_14 = arith.constant 0 : index
      %c0_15 = arith.constant 0 : index
      %16 = vector.load %arg4[%c0_13, %c0_14, %c0_15] : memref<1x8x1xf32, #tpu.memory_space<vmem>>, vector<1x8x1xf32>
      tpu.vector_store %arg4[%c0_13, %c0_14, %c0_15], %15 {strides = array<i32>} : memref<1x8x1xf32, #tpu.memory_space<vmem>>, vector<1x8x1xf32>,
    } else {
    }
    %c0 = arith.constant 0 : index
    %c0_1 = arith.constant 0 : index
    %3 = vector.load %arg2[%c0, %c0_1] : memref<8x96xf32, #tpu.memory_space<vmem>>, vector<8x96xf32>
    %c0_2 = arith.constant 0 : index
    %c0_3 = arith.constant 0 : index
    %4 = vector.load %arg3[%c0_2, %c0_3] : memref<500x96xf32, #tpu.memory_space<vmem>>, vector<500x96xf32>
    %cst = arith.constant dense<0.000000e+00> : vector<8x500xf32>
    %5 = tpu.matmul %3, %4, %cst {dimension_numbers = #tpu.dot_dimension_numbers<[1], [1], [0], [0], [0, 0, 1, 0], [], []>} : vector<8x96xf32>, vector<500x96xf32>, vector<8x500xf32> -> vector<8x500xf32>
    %cst_4 = arith.constant 1.000000e+01 : f32
    %6 = vector.broadcast %cst_4 : f32 to vector<8x500xf32>
    %7 = arith.mulf %5, %6 : vector<8x500xf32>
    %8 = math.exp %7 : vector<8x500xf32>
    %cst_5 = arith.constant dense<0.000000e+00> : vector<8xf32>
    %9 = vector.multi_reduction <add>, %8, %cst_5 [1] : vector<8x500xf32> to vector<8xf32>
    %10 = vector.shape_cast %9 : vector<8xf32> to vector<8x1xf32>
    %c0_6 = arith.constant 0 : index
    %c0_7 = arith.constant 0 : index
    %c0_8 = arith.constant 0 : index
    %11 = vector.load %arg4[%c0_6, %c0_7, %c0_8] : memref<1x8x1xf32, #tpu.memory_space<vmem>>, vector<1x8x1xf32>
    %12 = vector.shape_cast %10 : vector<8x1xf32> to vector<1x8x1xf32>
    %13 = arith.addf %11, %12 : vector<1x8x1xf32>
    %c0_9 = arith.constant 0 : index
    %c0_10 = arith.constant 0 : index
    %c0_11 = arith.constant 0 : index
    %14 = vector.load %arg4[%c0_9, %c0_10, %c0_11] : memref<1x8x1xf32, #tpu.memory_space<vmem>>, vector<1x8x1xf32>
    tpu.vector_store %arg4[%c0_9, %c0_10, %c0_11], %13 {strides = array<i32>} : memref<1x8x1xf32, #tpu.memory_space<vmem>>, vector<1x8x1xf32>,
    return
  }
  func.func @transform_0(%arg0: i32, %arg1: i32) -> (i32, i32) {
    %c0_i32 = arith.constant 0 : i32
    %c0_i32_0 = arith.constant 0 : i32
    %c0_i32_1 = arith.constant 0 : i32
    return %c0_i32, %c0_i32_0 : i32, i32
  }
  func.func @transform_1(%arg0: i32, %arg1: i32) -> (i32, i32) {
    %c1_i32 = arith.constant 1 : i32
    %0 = arith.muli %arg0, %c1_i32 : i32
    %1 = arith.addi %0, %arg1 : i32
    %c0_i32 = arith.constant 0 : i32
    %c0_i32_0 = arith.constant 0 : i32
    return %1, %c0_i32 : i32, i32
  }
  func.func @transform_2(%arg0: i32, %arg1: i32) -> (i32, i32, i32) {
    %c0_i32 = arith.constant 0 : i32
    %c0_i32_0 = arith.constant 0 : i32
    %c0_i32_1 = arith.constant 0 : i32
    return %arg0, %c0_i32, %c0_i32_0 : i32, i32, i32
  }
}

</mosaic_0001>

<llo_original>
// kernel: tpu_custom_call.1
$region0: #{tpu_custom_call.1}
  #allocation0 [shape = 'u32[]', space=smem, size = 0x4, offset = 0x4, fixed_abs, tag = 'smem constant byte address 0x4 - core index']
  #allocation1 [shape = 'u32[144,128]{1,0:T(1,128)}', space=vmem, size = 0x12000, scoped, tag = 'internal scratch']
  %s0 = inlined_call_operand.vmem [shape: f32[8,96], index: 0, kind: input, shape index: {}]
  %s1 = inlined_call_operand.vmem [shape: f32[500,96], index: 1, kind: input, shape index: {}]
  %s2 = inlined_call_operand.vmem [shape: f32[1,8,1], index: 2, kind: output, shape index: {}]
  %s3 = sld [smem:[#allocation0]]
  $region22: #{tpu_custom_call.1} parent=0
    _
  %s5 = ssub.s32 1, %s3
  %s6 = scalar_select 0, %s5, %s3
  // Predicated region
  $region2: #{tpu_custom_call.1} parent=0 // pred_check
    _
  $region3: #{tpu_custom_call.1} parent=0 // pred_check_branch
    %8 = sbr.rel (0) target = $region5
  $region4: #{tpu_custom_call.1} parent=0 // pred_region
    _
  $region5: #{tpu_custom_call.1} parent=0 // pred_fallthru
    _
  // Predicated region
  $region6: #{tpu_custom_call.1} parent=0 // pred_check
    _
  $region7: #{tpu_custom_call.1} parent=0 // pred_check_branch
    %10 = sbr.rel (0) target = $region9
  $region8: #{tpu_custom_call.1} parent=0 // pred_region
    %s11 = sadd.s32 0, 0
    %s12 = smul.u32 63, %s11
    %p13 = scmp.lt.s32.totalorder %s12, 62
    %s14 = scalar_select %p13, %s12, 62
    %s15 = smul.addr %s14, 8
    %s16 = scalar_lea.vmem %s1, %s15
    %s17 = sadd.s32 0, 0
    %s18 = smul.u32 63, %s17
  $region9: #{tpu_custom_call.1} parent=0 // pred_fallthru
    _
  %s19 = sadd.s32 0, 0
  %s20 = smul.u32 63, %s19
  %p21 = scmp.lt.s32.totalorder %s20, 62
  %s22 = scalar_select %p21, %s20, 62
  %s23 = smul.addr %s22, 8
  %s24 = scalar_lea.vmem %s1, %s23
  %s25 = sadd.s32 0, 0
  %s26 = smul.u32 63, %s25
  %p27 = scmp.lt.s32.totalorder %s26, 62
  %s28 = scalar_select %p27, %s26, 62
  %s29 = smul.addr %s28, 8
  %s30 = scalar_lea.vmem %s1, %s29
  %s31 = sadd.s32 0, 0
  %s32 = smul.u32 63, %s31
  %p33 = scmp.eq.s32.totalorder 0, 0
  // Predicated region
  $region10: #{tpu_custom_call.1} parent=0 // pred_check
    %p34 = pneg %p33
  $region11: #{tpu_custom_call.1} parent=0 // pred_check_branch
    %36 = sbr.rel (%p34) target = $region13
  $region12: #{tpu_custom_call.1} parent=0 // pred_region
    %vm37 = vcmask 7168
    %38 = vst.msk [vmem:[%s2] sm:$0xff] %vm37, 0.0
  $region13: #{tpu_custom_call.1} parent=0 // pred_fallthru
    _
  %v39 = vld [vmem:[%s0] sm:$0xff]
  %v40 = vld [vmem:[%s30] sm:$0xff]
  %v41 = vld [vmem:[%s30 + $0x8] sm:$0xff]
  %v42 = vld [vmem:[%s30 + $0x10] sm:$0xff]
  %v43 = vld [vmem:[%s30 + $0x18] sm:$0xff]
  %v44 = vld [vmem:[%s30 + $0x20] sm:$0xff]
  %v45 = vld [vmem:[%s30 + $0x28] sm:$0xff]
  %v46 = vld [vmem:[%s30 + $0x30] sm:$0xff]
  %v47 = vld [vmem:[%s30 + $0x38] sm:$0xff]
  %v48 = vld [vmem:[%s30 + $0x40] sm:$0xff]
  %v49 = vld [vmem:[%s30 + $0x48] sm:$0xff]
  %v50 = vld [vmem:[%s30 + $0x50] sm:$0xff]
  %v51 = vld [vmem:[%s30 + $0x58] sm:$0xff]
  %v52 = vld [vmem:[%s30 + $0x60] sm:$0xff]
  %v53 = vld [vmem:[%s30 + $0x68] sm:$0xff]
  %v54 = vld [vmem:[%s30 + $0x70] sm:$0xff]
  %v55 = vld [vmem:[%s30 + $0x78] sm:$0xff]
  %v56 = vld [vmem:[%s30 + $0x80] sm:$0xff]
  %v57 = vld [vmem:[%s30 + $0x88] sm:$0xff]
  %v58 = vld [vmem:[%s30 + $0x90] sm:$0xff]
  %v59 = vld [vmem:[%s30 + $0x98] sm:$0xff]
  %v60 = vld [vmem:[%s30 + $0xa0] sm:$0xff]
  %v61 = vld [vmem:[%s30 + $0xa8] sm:$0xff]
  %v62 = vld [vmem:[%s30 + $0xb0] sm:$0xff]
  %v63 = vld [vmem:[%s30 + $0xb8] sm:$0xff]
  %v64 = vld [vmem:[%s30 + $0xc0] sm:$0xff]
  %v65 = vld [vmem:[%s30 + $0xc8] sm:$0xff]
  %v66 = vld [vmem:[%s30 + $0xd0] sm:$0xff]
  %v67 = vld [vmem:[%s30 + $0xd8] sm:$0xff]
  %v68 = vld [vmem:[%s30 + $0xe0] sm:$0xff]
  %v69 = vld [vmem:[%s30 + $0xe8] sm:$0xff]
  %v70 = vld [vmem:[%s30 + $0xf0] sm:$0xff]
  %v71 = vld [vmem:[%s30 + $0xf8] sm:$0xff]
  %v72 = vld [vmem:[%s30 + $0x100] sm:$0xff]
  %v73 = vld [vmem:[%s30 + $0x108] sm:$0xff]
  %v74 = vld [vmem:[%s30 + $0x110] sm:$0xff]
  %v75 = vld [vmem:[%s30 + $0x118] sm:$0xff]
  %v76 = vld [vmem:[%s30 + $0x120] sm:$0xff]
  %v77 = vld [vmem:[%s30 + $0x128] sm:$0xff]
  %v78 = vld [vmem:[%s30 + $0x130] sm:$0xff]
  %v79 = vld [vmem:[%s30 + $0x138] sm:$0xff]
  %v80 = vld [vmem:[%s30 + $0x140] sm:$0xff]
  %v81 = vld [vmem:[%s30 + $0x148] sm:$0xff]
  %v82 = vld [vmem:[%s30 + $0x150] sm:$0xff]
  %v83 = vld [vmem:[%s30 + $0x158] sm:$0xff]
  %v84 = vld [vmem:[%s30 + $0x160] sm:$0xff]
  %v85 = vld [vmem:[%s30 + $0x168] sm:$0xff]
  %v86 = vld [vmem:[%s30 + $0x170] sm:$0xff]
  %v87 = vld [vmem:[%s30 + $0x178] sm:$0xff]
  %v88 = vld [vmem:[%s30 + $0x180] sm:$0xff]
  %v89 = vld [vmem:[%s30 + $0x188] sm:$0xff]
  %v90 = vld [vmem:[%s30 + $0x190] sm:$0xff]
  %v91 = vld [vmem:[%s30 + $0x198] sm:$0xff]
  %v92 = vld [vmem:[%s30 + $0x1a0] sm:$0xff]
  %v93 = vld [vmem:[%s30 + $0x1a8] sm:$0xff]
  %v94 = vld [vmem:[%s30 + $0x1b0] sm:$0xff]
  %v95 = vld [vmem:[%s30 + $0x1b8] sm:$0xff]
  %v96 = vld [vmem:[%s30 + $0x1c0] sm:$0xff]
  %v97 = vld [vmem:[%s30 + $0x1c8] sm:$0xff]
  %v98 = vld [vmem:[%s30 + $0x1d0] sm:$0xff]
  %v99 = vld [vmem:[%s30 + $0x1d8] sm:$0xff]
  %v100 = vld [vmem:[%s30 + $0x1e0] sm:$0xff]
  %v101 = vld [vmem:[%s30 + $0x1e8] sm:$0xff]
  %v102 = vld [vmem:[%s30 + $0x1f0] sm:$0xf]
  %vm103 = vcmask 785408
  %v105 = vsel %vm103, %v39, 0
  %v108 = vsel %vm103, %v40, 0
  %v111 = vsel %vm103, %v41, 0
  %v114 = vsel %vm103, %v42, 0
  %v117 = vsel %vm103, %v43, 0
  %v120 = vsel %vm103, %v44, 0
  %v123 = vsel %vm103, %v45, 0
  %v126 = vsel %vm103, %v46, 0
  %v129 = vsel %vm103, %v47, 0
  %v132 = vsel %vm103, %v48, 0
  %v135 = vsel %vm103, %v49, 0
  %v138 = vsel %vm103, %v50, 0
  %v141 = vsel %vm103, %v51, 0
  %v144 = vsel %vm103, %v52, 0
  %v147 = vsel %vm103, %v53, 0
  %v150 = vsel %vm103, %v54, 0
  %v153 = vsel %vm103, %v55, 0
  %v156 = vsel %vm103, %v56, 0
  %v159 = vsel %vm103, %v57, 0
  %v162 = vsel %vm103, %v58, 0
  %v165 = vsel %vm103, %v59, 0
  %v168 = vsel %vm103, %v60, 0
  %v171 = vsel %vm103, %v61, 0
  %v174 = vsel %vm103, %v62, 0
  %v177 = vsel %vm103, %v63, 0
  %v180 = vsel %vm103, %v64, 0
  %v183 = vsel %vm103, %v65, 0
  %v186 = vsel %vm103, %v66, 0
  %v189 = vsel %vm103, %v67, 0
  %v192 = vsel %vm103, %v68, 0
  %v195 = vsel %vm103, %v69, 0
  %v198 = vsel %vm103, %v70, 0
  %v201 = vsel %vm103, %v71, 0
  %v204 = vsel %vm103, %v72, 0
  %v207 = vsel %vm103, %v73, 0
  %v210 = vsel %vm103, %v74, 0
  %v213 = vsel %vm103, %v75, 0
  %v216 = vsel %vm103, %v76, 0
  %v219 = vsel %vm103, %v77, 0
  %v222 = vsel %vm103, %v78, 0
  %v225 = vsel %vm103, %v79, 0
  %v228 = vsel %vm103, %v80, 0
  %v231 = vsel %vm103, %v81, 0
  %v234 = vsel %vm103, %v82, 0
  %v237 = vsel %vm103, %v83, 0
  %v240 = vsel %vm103, %v84, 0
  %v243 = vsel %vm103, %v85, 0
  %v246 = vsel %vm103, %v86, 0
  %v249 = vsel %vm103, %v87, 0
  %v252 = vsel %vm103, %v88, 0
  %v255 = vsel %vm103, %v89, 0
  %v258 = vsel %vm103, %v90, 0
  %v261 = vsel %vm103, %v91, 0
  %v264 = vsel %vm103, %v92, 0
  %v267 = vsel %vm103, %v93, 0
  %v270 = vsel %vm103, %v94, 0
  %v273 = vsel %vm103, %v95, 0
  %v276 = vsel %vm103, %v96, 0
  %v279 = vsel %vm103, %v97, 0
  %v282 = vsel %vm103, %v98, 0
  %v285 = vsel %vm103, %v99, 0
  %v288 = vsel %vm103, %v100, 0
  %v291 = vsel %vm103, %v101, 0
  %v294 = vsel %vm103, %v102, 0
  %296 = vmatprep.subr.mxu0 0.0
  %297 = vmatpush1.xpose.msra.mxu0 %v108
  %298 = vmatprep.subr.mxu0 0.0
  %299 = vmatpush1.xpose.msra.mxu0 %v111
  %300 = vmatprep.subr.mxu0 0.0
  %301 = vmatpush1.xpose.msra.mxu0 %v114
  %302 = vmatprep.subr.mxu0 0.0
  %303 = vmatpush1.xpose.msra.mxu0 %v117
  %304 = vmatprep.subr.mxu0 0.0
  %305 = vmatpush1.xpose.msra.mxu0 %v120
  %306 = vmatprep.subr.mxu0 0.0
  %307 = vmatpush1.xpose.msra.mxu0 %v123
  %308 = vmatprep.subr.mxu0 0.0
  %309 = vmatpush1.xpose.msra.mxu0 %v126
  %310 = vmatprep.subr.mxu0 0.0
  %311 = vmatpush1.xpose.msra.mxu0 %v129
  %312 = vmatprep.subr.mxu0 0.0
  %313 = vmatpush1.xpose.msra.mxu0 %v132
  %314 = vmatprep.subr.mxu0 0.0
  %315 = vmatpush1.xpose.msra.mxu0 %v135
  %316 = vmatprep.subr.mxu0 0.0
  %317 = vmatpush1.xpose.msra.mxu0 %v138
  %318 = vmatprep.subr.mxu0 0.0
  %319 = vmatpush1.xpose.msra.mxu0 %v141
  %320 = vmatprep.subr.mxu0 0.0
  %321 = vmatpush1.xpose.msra.mxu0 %v144
  %322 = vmatprep.subr.mxu0 0.0
  %323 = vmatpush1.xpose.msra.mxu0 %v147
  %324 = vmatprep.subr.mxu0 0.0
  %325 = vmatpush1.xpose.msra.mxu0 %v150
  %326 = vmatprep.subr.mxu0 0.0
  %327 = vmatpush1.xpose.msra.mxu0 %v153
  %328 = vmatprep.subr.mxu0 0.0
  %329 = vmatpush1.xpose.msra.mxu0 %v156
  %330 = vmatprep.subr.mxu0 0.0
  %331 = vmatpush1.xpose.msra.mxu0 %v159
  %332 = vmatprep.subr.mxu0 0.0
  %333 = vmatpush1.xpose.msra.mxu0 %v162
  %334 = vmatprep.subr.mxu0 0.0
  %335 = vmatpush1.xpose.msra.mxu0 %v165
  %336 = vmatprep.subr.mxu0 0.0
  %337 = vmatpush1.xpose.msra.mxu0 %v168
  %338 = vmatprep.subr.mxu0 0.0
  %339 = vmatpush1.xpose.msra.mxu0 %v171
  %340 = vmatprep.subr.mxu0 0.0
  %341 = vmatpush1.xpose.msra.mxu0 %v174
  %342 = vmatprep.subr.mxu0 0.0
  %343 = vmatpush1.xpose.msra.mxu0 %v177
  %344 = vmatprep.subr.mxu0 0.0
  %345 = vmatpush1.xpose.msra.mxu0 %v180
  %346 = vmatprep.subr.mxu0 0.0
  %347 = vmatpush1.xpose.msra.mxu0 %v183
  %348 = vmatprep.subr.mxu0 0.0
  %349 = vmatpush1.xpose.msra.mxu0 %v186
  %350 = vmatprep.subr.mxu0 0.0
  %351 = vmatpush1.xpose.msra.mxu0 %v189
  %352 = vmatprep.subr.mxu0 0.0
  %353 = vmatpush1.xpose.msra.mxu0 %v192
  %354 = vmatprep.subr.mxu0 0.0
  %355 = vmatpush1.xpose.msra.mxu0 %v195
  %356 = vmatprep.subr.mxu0 0.0
  %357 = vmatpush1.xpose.msra.mxu0 %v198
  %358 = vmatprep.subr.mxu0 0.0
  %359 = vmatpush1.xpose.msra.mxu0 %v201
  %360 = vmatprep.mubr.f32.mxu0 0.0
  %361 = vmatmul.mubr.f32.gmra.mrb[0].mxu0 %v105
  %v362 = vpop.f32.mrb[0].mxu0
  %v363 = vadd.f32 0.0, %v362
  %v364 = vpop.f32.mrb[0].mxu0
  %v365 = vadd.f32 0.0, %v364
  %366 = vdwg.mxu0
  %367 = vmatprep.subr.mxu0 0.0
  %368 = vmatpush1.xpose.msra.mxu0 %v204
  %369 = vmatprep.subr.mxu0 0.0
  %370 = vmatpush1.xpose.msra.mxu0 %v207
  %371 = vmatprep.subr.mxu0 0.0
  %372 = vmatpush1.xpose.msra.mxu0 %v210
  %373 = vmatprep.subr.mxu0 0.0
  %374 = vmatpush1.xpose.msra.mxu0 %v213
  %375 = vmatprep.subr.mxu0 0.0
  %376 = vmatpush1.xpose.msra.mxu0 %v216
  %377 = vmatprep.subr.mxu0 0.0
  %378 = vmatpush1.xpose.msra.mxu0 %v219
  %379 = vmatprep.subr.mxu0 0.0
  %380 = vmatpush1.xpose.msra.mxu0 %v222
  %381 = vmatprep.subr.mxu0 0.0
  %382 = vmatpush1.xpose.msra.mxu0 %v225
  %383 = vmatprep.subr.mxu0 0.0
  %384 = vmatpush1.xpose.msra.mxu0 %v228
  %385 = vmatprep.subr.mxu0 0.0
  %386 = vmatpush1.xpose.msra.mxu0 %v231
  %387 = vmatprep.subr.mxu0 0.0
  %388 = vmatpush1.xpose.msra.mxu0 %v234
  %389 = vmatprep.subr.mxu0 0.0
  %390 = vmatpush1.xpose.msra.mxu0 %v237
  %391 = vmatprep.subr.mxu0 0.0
  %392 = vmatpush1.xpose.msra.mxu0 %v240
  %393 = vmatprep.subr.mxu0 0.0
  %394 = vmatpush1.xpose.msra.mxu0 %v243
  %395 = vmatprep.subr.mxu0 0.0
  %396 = vmatpush1.xpose.msra.mxu0 %v246
  %397 = vmatprep.subr.mxu0 0.0
  %398 = vmatpush1.xpose.msra.mxu0 %v249
  %399 = vmatprep.subr.mxu0 0.0
  %400 = vmatpush1.xpose.msra.mxu0 %v252
  %401 = vmatprep.subr.mxu0 0.0
  %402 = vmatpush1.xpose.msra.mxu0 %v255
  %403 = vmatprep.subr.mxu0 0.0
  %404 = vmatpush1.xpose.msra.mxu0 %v258
  %405 = vmatprep.subr.mxu0 0.0
  %406 = vmatpush1.xpose.msra.mxu0 %v261
  %407 = vmatprep.subr.mxu0 0.0
  %408 = vmatpush1.xpose.msra.mxu0 %v264
  %409 = vmatprep.subr.mxu0 0.0
  %410 = vmatpush1.xpose.msra.mxu0 %v267
  %411 = vmatprep.subr.mxu0 0.0
  %412 = vmatpush1.xpose.msra.mxu0 %v270
  %413 = vmatprep.subr.mxu0 0.0
  %414 = vmatpush1.xpose.msra.mxu0 %v273
  %415 = vmatprep.subr.mxu0 0.0
  %416 = vmatpush1.xpose.msra.mxu0 %v276
  %417 = vmatprep.subr.mxu0 0.0
  %418 = vmatpush1.xpose.msra.mxu0 %v279
  %419 = vmatprep.subr.mxu0 0.0
  %420 = vmatpush1.xpose.msra.mxu0 %v282
  %421 = vmatprep.subr.mxu0 0.0
  %422 = vmatpush1.xpose.msra.mxu0 %v285
  %423 = vmatprep.subr.mxu0 0.0
  %424 = vmatpush1.xpose.msra.mxu0 %v288
  %425 = vmatprep.subr.mxu0 0.0
  %426 = vmatpush1.xpose.msra.mxu0 %v291
  %427 = vmatprep.subr.mxu0 0.0
  %428 = vmatpush1.xpose.msra.mxu0 %v294
  %429 = vmatprep.subr.mxu0 0.0
  %430 = vmatpush1.xpose.msra.mxu0 0.0
  %431 = vmatprep.mubr.f32.mxu0 0.0
  %432 = vmatmul.mubr.f32.gmra.mrb[0].mxu0 %v105
  %v433 = vpop.f32.mrb[0].mxu0
  %v434 = vadd.f32 0.0, %v433
  %v435 = vpop.f32.mrb[0].mxu0
  %v436 = vadd.f32 0.0, %v435
  %437 = vdwg.mxu0
  %v438 = vmul.f32 %v363, 10.0
  %v439 = vmul.f32 %v365, 10.0
  %v440 = vmul.f32 %v434, 10.0
  %v441 = vmul.f32 %v436, 10.0
  %v442 = vmul.f32 %v438, 1.442695
  %v443 = vpow.pop %v442
  %v444 = vmul.f32 %v439, 1.442695
  %v445 = vpow.pop %v444
  %v446 = vmul.f32 %v440, 1.442695
  %v447 = vpow.pop %v446
  %v448 = vmul.f32 %v441, 1.442695
  %v449 = vpow.pop %v448
  %v450 = vadd.f32 %v443, %v445
  %v451 = vadd.f32 %v450, %v447
  %vm452 = vcmask 949248
  %v453 = vsel %vm452, %v449, 0.0
  %v454 = vadd.f32 %v451, %v453
  %455 = vadd.xlane.f32.xlu0 %v454
  %v456 = vpop.xlane.xlu0 %455
  %v457 = vld [vmem:[%s2] sm:$0xff]
  %v458 = vadd.f32 %v457, %v456
  %vm459 = vcmask 7168
  %460 = vst.msk [vmem:[%s2] sm:$0xff] %vm459, %v458
  // Predicated region
  $region14: #{tpu_custom_call.1} parent=0 // pred_check
    _
  $region15: #{tpu_custom_call.1} parent=0 // pred_check_branch
    %462 = sbr.rel (0) target = $region17
  $region16: #{tpu_custom_call.1} parent=0 // pred_region
    _
  $region17: #{tpu_custom_call.1} parent=0 // pred_fallthru
    _
  // Predicated region
  $region18: #{tpu_custom_call.1} parent=0 // pred_check
    _
  $region19: #{tpu_custom_call.1} parent=0 // pred_check_branch
    %464 = sbr.rel (0) target = $region21
  $region20: #{tpu_custom_call.1} parent=0 // pred_region
    _
  $region21: #{tpu_custom_call.1} parent=0 // pred_fallthru
    _

</llo_original>
